<compile_context>
chip_gen: v7x
topology: tpu7x:2x2x1
jax: 0.10.0
libtpu: 0.0.40
codegen_flags: <defaults>
</compile_context>

<pallas_src>
import functools
from math import sqrt

import jax
import jax.numpy as jnp
from jax.experimental import pallas as pl
from jax.experimental.pallas import tpu as pltpu

_LANE = 128
_SUBLANE = 8


def _round_up(x, m):
    return ((x + m - 1) // m) * m


# ----------------------------------------------------------------------------
# Pallas kernel: the whole 3-layer forward model for one batch tile.
# All weight operands are pre-transposed to [in, out] and zero-padded so the
# output (lane) dims are multiples of 128.
# ----------------------------------------------------------------------------
def _seer_forward_kernel(z_ref, ah_ref,
                         w0z_ref, wah_ref, bcat_ref,
                         w2y_ref, w4y_ref,
                         out_ref, *, Dp, Fp):
    z = z_ref[...]
    ah = ah_ref[...]

    # All three a|h contributions (+ all three biases) in one wide MXU push:
    #   c = ah @ [w0ah | w2ah | w4ah] + [b0 | b2 | b4]   -> [tile, Dp+Dp+Fp]
    c = (jnp.dot(ah, wah_ref[...], preferred_element_type=jnp.float32)
         + bcat_ref[...])

    # layer 0: Linear(feature + action + hidden -> forward_model_dim)
    y1 = jnp.dot(z, w0z_ref[...], preferred_element_type=jnp.float32) \
        + c[:, 0:Dp]

    # layer 2: Linear(forward_model_dim + action + hidden -> forward_model_dim)
    y2 = jnp.dot(y1, w2y_ref[...], preferred_element_type=jnp.float32) \
        + c[:, Dp:2 * Dp]

    # layer 4: Linear(forward_model_dim + action + hidden -> feature_dim)
    y3 = jnp.dot(y2, w4y_ref[...], preferred_element_type=jnp.float32) \
        + c[:, 2 * Dp:2 * Dp + Fp]

    out_ref[...] = y3.astype(out_ref.dtype)


# ----------------------------------------------------------------------------
# One-time parameter preparation: split the PyTorch [out, in] weights along the
# concatenation axis, transpose to [in, out], fuse the a|h slices (and biases)
# column-wise, and pad the output dims up to a multiple of 128 lanes.
# ----------------------------------------------------------------------------
def prepare_params(params, feature_dim, action_dim, hidden_dim, forward_model_dim):
    F, A, H, D = feature_dim, action_dim, hidden_dim, forward_model_dim
    Dp = _round_up(D, _LANE)
    Fp = _round_up(F, _LANE)

    def pad_cols(w, cols):
        return w if w.shape[1] == cols else jnp.pad(w, ((0, 0), (0, cols - w.shape[1])))

    def pad_rows(w, rows):
        return w if w.shape[0] == rows else jnp.pad(w, ((0, rows - w.shape[0]), (0, 0)))

    w0, b0 = params["w0"], params["b0"]   # [D, F+A+H], [D]
    w2, b2 = params["w2"], params["b2"]   # [D, D+A+H], [D]
    w4, b4 = params["w4"], params["b4"]   # [F, D+A+H], [F]

    # per-layer "y" (dense) weights, transposed + lane-padded
    w0z = pad_cols(w0[:, :F].T, Dp)                    # [F,   Dp]
    w2y = pad_cols(pad_rows(w2[:, :D].T, Dp), Dp)      # [Dp,  Dp]
    w4y = pad_cols(pad_rows(w4[:, :D].T, Dp), Fp)      # [Dp,  Fp]

    # fused a|h weights and biases (one wide lane-dense matmul in the kernel)
    w0ah = pad_cols(w0[:, F:].T, Dp)                   # [A+H, Dp]
    w2ah = pad_cols(w2[:, D:].T, Dp)                   # [A+H, Dp]
    w4ah = pad_cols(w4[:, D:].T, Fp)                   # [A+H, Fp]
    wah = jnp.concatenate([w0ah, w2ah, w4ah], axis=1)  # [A+H, 2*Dp+Fp]

    bcat = jnp.concatenate([
        pad_cols(b0.reshape(1, D), Dp),
        pad_cols(b2.reshape(1, D), Dp),
        pad_cols(b4.reshape(1, F), Fp),
    ], axis=1)                                         # [1, 2*Dp+Fp]

    prep = {"w0z": w0z, "wah": wah, "bcat": bcat, "w2y": w2y, "w4y": w4y}
    dims = {"F": F, "A": A, "H": H, "D": D, "Dp": Dp, "Fp": Fp}
    return prep, dims


# ----------------------------------------------------------------------------
# Wrapper: tile over (padded) batch, single fused kernel per tile.
# ----------------------------------------------------------------------------
def forward_model_seer(z_state, action, h_next_state, prep, dims, *, batch_tile=512):
    B = z_state.shape[0]
    F, A, H = dims["F"], dims["A"], dims["H"]
    Dp, Fp = dims["Dp"], dims["Fp"]
    AH = A + H
    Wah = 2 * Dp + Fp

    # a|h concatenated once per call (tiny HBM-side concat).
    ah = jnp.concatenate([action, h_next_state], axis=1)          # [B, A+H]

    # Batch tiling: big tiles, sublane-aligned, pad B if not divisible.
    tile = max(_SUBLANE, min(batch_tile, _round_up(B, _SUBLANE)))
    tile = _round_up(tile, _SUBLANE)
    B_pad = _round_up(B, tile)

    def pad_batch(x):
        return x if x.shape[0] == B_pad else jnp.pad(x, ((0, B_pad - x.shape[0]), (0, 0)))

    z_p = pad_batch(z_state)
    ah_p = pad_batch(ah)

    grid = (B_pad // tile,)

    def batch_spec(cols):
        return pl.BlockSpec((tile, cols), lambda i: (i, 0))

    def const_spec(rows, cols):
        # full-array block, identical for every grid step (weights / biases
        # stay resident in VMEM across the batch grid)
        return pl.BlockSpec((rows, cols), lambda i: (0, 0))

    kernel = functools.partial(_seer_forward_kernel, Dp=Dp, Fp=Fp)

    out = pl.pallas_call(
        kernel,
        out_shape=jax.ShapeDtypeStruct((B_pad, Fp), z_state.dtype),
        grid_spec=pltpu.PrefetchScalarGridSpec(
            num_scalar_prefetch=0,
            grid=grid,
            in_specs=[
                batch_spec(F),            # z tile
                batch_spec(AH),           # a|h tile
                const_spec(F, Dp),        # w0z
                const_spec(AH, Wah),      # fused a|h weights
                const_spec(1, Wah),       # fused biases
                const_spec(Dp, Dp),       # w2y
                const_spec(Dp, Fp),       # w4y
            ],
            out_specs=pl.BlockSpec((tile, Fp), lambda i: (i, 0)),
        ),
        compiler_params=pltpu.CompilerParams(
            dimension_semantics=("parallel",)),
    )(z_p, ah_p,
      prep["w0z"], prep["wah"], prep["bcat"],
      prep["w2y"], prep["w4y"])

    return out[:B, :F]


# ----------------------------------------------------------------------------
# Deterministic parameter init (orthogonal, gain=sqrt(2), zero bias) — matches
# the shapes implied by the module's __init__.
# ----------------------------------------------------------------------------
def init_params(key, feature_dim, action_dim, hidden_dim, forward_model_dim):
    ortho = jax.nn.initializers.orthogonal(scale=sqrt(2))
    k0, k2, k4 = jax.random.split(key, 3)
    in0 = feature_dim + action_dim + hidden_dim
    in2 = forward_model_dim + action_dim + hidden_dim
    in4 = forward_model_dim + action_dim + hidden_dim
    return {
        "w0": ortho(k0, (forward_model_dim, in0), jnp.float32),
        "b0": jnp.zeros((forward_model_dim,), jnp.float32),
        "w2": ortho(k2, (forward_model_dim, in2), jnp.float32),
        "b2": jnp.zeros((forward_model_dim,), jnp.float32),
        "w4": ortho(k4, (feature_dim, in4), jnp.float32),
        "b4": jnp.zeros((feature_dim,), jnp.float32),
    }


# Pure-JAX reference for correctness check (mirrors the PyTorch forward:
# forward_model[0]/[2]/[4] only — no GELU is applied by the reference code).
def _reference(z, a, h, p):
    y = jnp.concatenate([z, a, h], axis=1) @ p["w0"].T + p["b0"]
    y = jnp.concatenate([y, a, h], axis=1) @ p["w2"].T + p["b2"]
    y = jnp.concatenate([y, a, h], axis=1) @ p["w4"].T + p["b4"]
    return y


if __name__ == "__main__":
    # small, module-consistent config
    batch = 16
    feature_dim = 32
    action_dim = 8
    hidden_dim = 16
    forward_model_dim = 64

    key = jax.random.PRNGKey(0)
    kp, kz, ka, kh = jax.random.split(key, 4)

    params = init_params(kp, feature_dim, action_dim, hidden_dim, forward_model_dim)
    # one-time parameter prep (split / transpose / fuse a|h + biases / lane-pad)
    prep, dims = prepare_params(params, feature_dim, action_dim, hidden_dim,
                                forward_model_dim)

    z_state = jax.random.normal(kz, (batch, feature_dim), jnp.float32)
    # one-hot actions, as is typical for this module's action input
    action_ids = jax.random.randint(ka, (batch,), 0, action_dim)
    action = jax.nn.one_hot(action_ids, action_dim, dtype=jnp.float32)
    h_next_state = jax.random.normal(kh, (batch, hidden_dim), jnp.float32)

    out = forward_model_seer(z_state, action, h_next_state, prep, dims,
                             batch_tile=512)
    out = jax.block_until_ready(out)

    ref = _reference(z_state, action, h_next_state, params)
    assert out.shape == (batch, feature_dim)
    assert jnp.allclose(out, ref, atol=1e-4, rtol=1e-4), "mismatch vs reference"

    print("KERNEL_OK")
</pallas_src>

<mosaic_0001>
module attributes {stable_mosaic.version = 11 : i64} {
  func.func @_seer_forward_kernel(%arg0: i32, %arg1: memref<16x32xf32, #tpu.memory_space<vmem>>, %arg2: memref<16x24xf32, #tpu.memory_space<vmem>>, %arg3: memref<32x128xf32, #tpu.memory_space<vmem>>, %arg4: memref<24x384xf32, #tpu.memory_space<vmem>>, %arg5: memref<1x384xf32, #tpu.memory_space<vmem>>, %arg6: memref<128x128xf32, #tpu.memory_space<vmem>>, %arg7: memref<128x128xf32, #tpu.memory_space<vmem>>, %arg8: memref<16x128xf32, #tpu.memory_space<vmem>>) attributes {dimension_semantics = [#tpu.dimension_semantics<parallel>], iteration_bounds = array<i64: 1>, scalar_prefetch = 0 : i64, scratch_operands = 0 : i64, tpu.core_type = #tpu.core_type<tc>, window_params = [{transform_indices = @transform_0, window_bounds = array<i64: 16, 32>}, {transform_indices = @transform_1, window_bounds = array<i64: 16, 24>}, {pipeline_mode = #tpu.pipeline_mode<synchronous>, transform_indices = @transform_2, window_bounds = array<i64: 32, 128>}, {pipeline_mode = #tpu.pipeline_mode<synchronous>, transform_indices = @transform_3, window_bounds = array<i64: 24, 384>}, {pipeline_mode = #tpu.pipeline_mode<synchronous>, transform_indices = @transform_4, window_bounds = array<i64: 1, 384>}, {pipeline_mode = #tpu.pipeline_mode<synchronous>, transform_indices = @transform_5, window_bounds = array<i64: 128, 128>}, {pipeline_mode = #tpu.pipeline_mode<synchronous>, transform_indices = @transform_6, window_bounds = array<i64: 128, 128>}, {transform_indices = @transform_7, window_bounds = array<i64: 16, 128>}]} {
    %c0 = arith.constant 0 : index
    %c0_0 = arith.constant 0 : index
    %0 = vector.load %arg1[%c0, %c0_0] : memref<16x32xf32, #tpu.memory_space<vmem>>, vector<16x32xf32>
    %c0_1 = arith.constant 0 : index
    %c0_2 = arith.constant 0 : index
    %1 = vector.load %arg2[%c0_1, %c0_2] : memref<16x24xf32, #tpu.memory_space<vmem>>, vector<16x24xf32>
    %c0_3 = arith.constant 0 : index
    %c0_4 = arith.constant 0 : index
    %2 = vector.load %arg4[%c0_3, %c0_4] : memref<24x384xf32, #tpu.memory_space<vmem>>, vector<24x384xf32>
    %cst = arith.constant dense<0.000000e+00> : vector<16x384xf32>
    %3 = tpu.matmul %1, %2, %cst {dimension_numbers = #tpu.dot_dimension_numbers<[1], [0], [0], [1], [0, 0, 1, 1], [], []>} : vector<16x24xf32>, vector<24x384xf32>, vector<16x384xf32> -> vector<16x384xf32>
    %c0_5 = arith.constant 0 : index
    %c0_6 = arith.constant 0 : index
    %4 = vector.load %arg5[%c0_5, %c0_6] : memref<1x384xf32, #tpu.memory_space<vmem>>, vector<1x384xf32>
    %5 = vector.broadcast %4 : vector<1x384xf32> to vector<16x384xf32>
    %6 = arith.addf %3, %5 : vector<16x384xf32>
    %c0_7 = arith.constant 0 : index
    %c0_8 = arith.constant 0 : index
    %7 = vector.load %arg3[%c0_7, %c0_8] : memref<32x128xf32, #tpu.memory_space<vmem>>, vector<32x128xf32>
    %cst_9 = arith.constant dense<0.000000e+00> : vector<16x128xf32>
    %8 = tpu.matmul %0, %7, %cst_9 {dimension_numbers = #tpu.dot_dimension_numbers<[1], [0], [0], [1], [0, 0, 1, 1], [], []>} : vector<16x32xf32>, vector<32x128xf32>, vector<16x128xf32> -> vector<16x128xf32>
    %9 = vector.extract_strided_slice %6 {offsets = [0, 0], sizes = [16, 128], strides = [1, 1]} : vector<16x384xf32> to vector<16x128xf32>
    %10 = arith.addf %8, %9 : vector<16x128xf32>
    %c0_10 = arith.constant 0 : index
    %c0_11 = arith.constant 0 : index
    %11 = vector.load %arg6[%c0_10, %c0_11] : memref<128x128xf32, #tpu.memory_space<vmem>>, vector<128x128xf32>
    %cst_12 = arith.constant dense<0.000000e+00> : vector<16x128xf32>
    %12 = tpu.matmul %10, %11, %cst_12 {dimension_numbers = #tpu.dot_dimension_numbers<[1], [0], [0], [1], [0, 0, 1, 1], [], []>} : vector<16x128xf32>, vector<128x128xf32>, vector<16x128xf32> -> vector<16x128xf32>
    %13 = vector.extract_strided_slice %6 {offsets = [0, 128], sizes = [16, 128], strides = [1, 1]} : vector<16x384xf32> to vector<16x128xf32>
    %14 = arith.addf %12, %13 : vector<16x128xf32>
    %c0_13 = arith.constant 0 : index
    %c0_14 = arith.constant 0 : index
    %15 = vector.load %arg7[%c0_13, %c0_14] : memref<128x128xf32, #tpu.memory_space<vmem>>, vector<128x128xf32>
    %cst_15 = arith.constant dense<0.000000e+00> : vector<16x128xf32>
    %16 = tpu.matmul %14, %15, %cst_15 {dimension_numbers = #tpu.dot_dimension_numbers<[1], [0], [0], [1], [0, 0, 1, 1], [], []>} : vector<16x128xf32>, vector<128x128xf32>, vector<16x128xf32> -> vector<16x128xf32>
    %17 = vector.extract_strided_slice %6 {offsets = [0, 256], sizes = [16, 128], strides = [1, 1]} : vector<16x384xf32> to vector<16x128xf32>
    %18 = arith.addf %16, %17 : vector<16x128xf32>
    %c0_16 = arith.constant 0 : index
    %c0_17 = arith.constant 0 : index
    %19 = vector.load %arg8[%c0_16, %c0_17] : memref<16x128xf32, #tpu.memory_space<vmem>>, vector<16x128xf32>
    tpu.vector_store %arg8[%c0_16, %c0_17], %18 {strides = array<i32>} : memref<16x128xf32, #tpu.memory_space<vmem>>, vector<16x128xf32>,
    return
  }
  func.func @transform_0(%arg0: i32) -> (i32, i32) {
    %c0_i32 = arith.constant 0 : i32
    %c0_i32_0 = arith.constant 0 : i32
    return %arg0, %c0_i32 : i32, i32
  }
  func.func @transform_1(%arg0: i32) -> (i32, i32) {
    %c0_i32 = arith.constant 0 : i32
    %c0_i32_0 = arith.constant 0 : i32
    return %arg0, %c0_i32 : i32, i32
  }
  func.func @transform_2(%arg0: i32) -> (i32, i32) {
    %c0_i32 = arith.constant 0 : i32
    %c0_i32_0 = arith.constant 0 : i32
    %c0_i32_1 = arith.constant 0 : i32
    return %c0_i32, %c0_i32_0 : i32, i32
  }
  func.func @transform_3(%arg0: i32) -> (i32, i32) {
    %c0_i32 = arith.constant 0 : i32
    %c0_i32_0 = arith.constant 0 : i32
    %c0_i32_1 = arith.constant 0 : i32
    return %c0_i32, %c0_i32_0 : i32, i32
  }
  func.func @transform_4(%arg0: i32) -> (i32, i32) {
    %c0_i32 = arith.constant 0 : i32
    %c0_i32_0 = arith.constant 0 : i32
    %c0_i32_1 = arith.constant 0 : i32
    return %c0_i32, %c0_i32_0 : i32, i32
  }
  func.func @transform_5(%arg0: i32) -> (i32, i32) {
    %c0_i32 = arith.constant 0 : i32
    %c0_i32_0 = arith.constant 0 : i32
    %c0_i32_1 = arith.constant 0 : i32
    return %c0_i32, %c0_i32_0 : i32, i32
  }
  func.func @transform_6(%arg0: i32) -> (i32, i32) {
    %c0_i32 = arith.constant 0 : i32
    %c0_i32_0 = arith.constant 0 : i32
    %c0_i32_1 = arith.constant 0 : i32
    return %c0_i32, %c0_i32_0 : i32, i32
  }
  func.func @transform_7(%arg0: i32) -> (i32, i32) {
    %c0_i32 = arith.constant 0 : i32
    %c0_i32_0 = arith.constant 0 : i32
    return %arg0, %c0_i32 : i32, i32
  }
}

</mosaic_0001>

<llo_original>
// kernel: tpu_custom_call.1
$region0: #{tpu_custom_call.1}
  #allocation0 [shape = 'u32[]', space=smem, size = 0x4, offset = 0x4, fixed_abs, tag = 'smem constant byte address 0x4 - core index']
  #allocation1 [shape = 'u32[144,128]{1,0:T(1,128)}', space=vmem, size = 0x12000, scoped, tag = 'internal scratch']
  %s0 = inlined_call_operand.hbm [shape: f32[16,32], index: 0, kind: input, shape index: {}]
  %s1 = inlined_call_operand.hbm [shape: f32[16,24], index: 1, kind: input, shape index: {}]
  %s2 = inlined_call_operand.hbm [shape: f32[32,128], index: 2, kind: input, shape index: {}]
  %s3 = inlined_call_operand.hbm [shape: f32[24,384], index: 3, kind: input, shape index: {}]
  %s4 = inlined_call_operand.vmem [shape: f32[1,384], index: 4, kind: input, shape index: {}]
  %s5 = inlined_call_operand.hbm [shape: f32[128,128], index: 5, kind: input, shape index: {}]
  %s6 = inlined_call_operand.hbm [shape: f32[128,128], index: 6, kind: input, shape index: {}]
  %s7 = inlined_call_operand.hbm [shape: f32[16,128], index: 7, kind: output, shape index: {}]
  %s8 = sld [smem:[#allocation0]]
  $region62: #{tpu_custom_call.1} parent=0
    _
  %s10 = ssub.s32 1, %s8
  %s11 = scalar_select 0, %s10, %s8
  $region1: #{tpu_custom_call.1} parent=0
    #allocation2 [shape = 'u8[8192]{0}', space=vmem, size = 0x2000, scoped, tag = 'input window, operand 0, single buffered']
    #allocation3 [shape = 's32[1]{0}', space=sflag, size = 0x4, scoped, tag = 'scoped memory for tpu_custom_call.1']
    #allocation4 [shape = 's32[1]{0}', space=sflag, size = 0x4, scoped, tag = 'scoped memory for tpu_custom_call.1']
    #allocation5 [shape = 'u8[8192]{0}', space=vmem, size = 0x2000, scoped, tag = 'input window, operand 1, single buffered']
    #allocation6 [shape = 's32[1]{0}', space=sflag, size = 0x4, scoped, tag = 'scoped memory for tpu_custom_call.1']
    #allocation7 [shape = 'u8[16384]{0}', space=vmem, size = 0x4000, scoped, tag = 'input window, operand 2, single buffered']
    #allocation8 [shape = 'u8[36864]{0}', space=vmem, size = 0x9000, scoped, tag = 'input window, operand 3, single buffered']
    #allocation9 [shape = 's32[1]{0}', space=sflag, size = 0x4, scoped, tag = 'scoped memory for tpu_custom_call.1']
    #allocation10 [shape = 'u8[65536]{0}', space=vmem, size = 0x10000, scoped, tag = 'input window, operand 5, single buffered']
    #allocation11 [shape = 'u8[65536]{0}', space=vmem, size = 0x10000, scoped, tag = 'input window, operand 6, single buffered']
    #allocation12 [shape = 's32[1]{0}', space=sflag, size = 0x4, scoped, tag = 'scoped memory for tpu_custom_call.1']
    #allocation13 [shape = 'u8[8192]{0}', space=vmem, size = 0x2000, scoped, tag = 'output window, operand 0, single buffered']
    %12 = vsyncpa [#allocation3], 0
    %13 = vsyncpa [#allocation6], 0
    %14 = vsyncpa [#allocation9], 0
    %15 = vsyncpa [#allocation12], 0
    %16 = vsyncpa [#allocation4], 0
    // Predicated region
    $region2: #{tpu_custom_call.1} parent=1 // pred_check
      _
    $region3: #{tpu_custom_call.1} parent=1 // pred_check_branch
      %18 = sbr.rel (0) target = $region5
    $region4: #{tpu_custom_call.1} parent=1 // pred_region
      %s20 = ssub.s32 256, 256
      %21 = vsyncadd [#allocation3], %s20
      %s22 = sshll.u32 [#allocation2], 4
      %s23 = int_to_ptr.vmem [resolvable:$true] %s22
      %28 = dma.hbm_to_vmem [thread:$0]  %s0, 256, %s23, [#allocation3], 128, 128, 8
    $region5: #{tpu_custom_call.1} parent=1 // pred_fallthru
      _
    // Predicated region
    $region6: #{tpu_custom_call.1} parent=1 // pred_check
      _
    $region7: #{tpu_custom_call.1} parent=1 // pred_check_branch
      %30 = sbr.rel (0) target = $region9
    $region8: #{tpu_custom_call.1} parent=1 // pred_region
      %s32 = ssub.s32 256, 256
      %33 = vsyncadd [#allocation6], %s32
      %s34 = sshll.u32 [#allocation5], 4
      %s35 = int_to_ptr.vmem [resolvable:$true] %s34
      %40 = dma.hbm_to_vmem [thread:$0]  %s1, 256, %s35, [#allocation6], 128, 128, 8
    $region9: #{tpu_custom_call.1} parent=1 // pred_fallthru
      _
    // Predicated region
    $region10: #{tpu_custom_call.1} parent=1 // pred_check
      _
    $region11: #{tpu_custom_call.1} parent=1 // pred_check_branch
      %42 = sbr.rel (0) target = $region13
    $region12: #{tpu_custom_call.1} parent=1 // pred_region
      %s44 = ssub.s32 512, 512
      %45 = vsyncadd [#allocation6], %s44
      %s46 = sshll.u32 [#allocation7], 4
      %s47 = int_to_ptr.vmem [resolvable:$true] %s46
      %52 = dma.hbm_to_vmem [thread:$0]  %s2, 512, %s47, [#allocation6], 128, 128, 8
    $region13: #{tpu_custom_call.1} parent=1 // pred_fallthru
      _
    // Predicated region
    $region14: #{tpu_custom_call.1} parent=1 // pred_check
      _
    $region15: #{tpu_custom_call.1} parent=1 // pred_check_branch
      %54 = sbr.rel (0) target = $region17
    $region16: #{tpu_custom_call.1} parent=1 // pred_region
      %s56 = ssub.s32 1152, 1152
      %57 = vsyncadd [#allocation9], %s56
      %s58 = sshll.u32 [#allocation8], 4
      %s59 = int_to_ptr.vmem [resolvable:$true] %s58
      %64 = dma.hbm_to_vmem [thread:$0]  %s3, 1152, %s59, [#allocation9], 384, 384, 24
    $region17: #{tpu_custom_call.1} parent=1 // pred_fallthru
      _
    // Predicated region
    $region18: #{tpu_custom_call.1} parent=1 // pred_check
      _
    $region19: #{tpu_custom_call.1} parent=1 // pred_check_branch
      %66 = sbr.rel (0) target = $region21
    $region20: #{tpu_custom_call.1} parent=1 // pred_region
      _
    $region21: #{tpu_custom_call.1} parent=1 // pred_fallthru
      _
    // Predicated region
    $region22: #{tpu_custom_call.1} parent=1 // pred_check
      _
    $region23: #{tpu_custom_call.1} parent=1 // pred_check_branch
      %68 = sbr.rel (0) target = $region25
    $region24: #{tpu_custom_call.1} parent=1 // pred_region
      %s70 = ssub.s32 2048, 2048
      %71 = vsyncadd [#allocation9], %s70
      %s72 = sshll.u32 [#allocation10], 4
      %s73 = int_to_ptr.vmem [resolvable:$true] %s72
      %78 = dma.hbm_to_vmem [thread:$0]  %s5, 2048, %s73, [#allocation9], 128, 128, 8
    $region25: #{tpu_custom_call.1} parent=1 // pred_fallthru
      _
    // Predicated region
    $region26: #{tpu_custom_call.1} parent=1 // pred_check
      _
    $region27: #{tpu_custom_call.1} parent=1 // pred_check_branch
      %80 = sbr.rel (0) target = $region29
    $region28: #{tpu_custom_call.1} parent=1 // pred_region
      %s82 = ssub.s32 2048, 2048
      %83 = vsyncadd [#allocation12], %s82
      %s84 = sshll.u32 [#allocation11], 4
      %s85 = int_to_ptr.vmem [resolvable:$true] %s84
      %90 = dma.hbm_to_vmem [thread:$0]  %s6, 2048, %s85, [#allocation12], 128, 128, 8
    $region29: #{tpu_custom_call.1} parent=1 // pred_fallthru
      _
    // Predicated region
    $region30: #{tpu_custom_call.1} parent=1 // pred_check
      _
    $region31: #{tpu_custom_call.1} parent=1 // pred_check_branch
      %92 = sbr.rel (0) target = $region33
    $region32: #{tpu_custom_call.1} parent=1 // pred_region
      %93 = dma.done [#allocation3], 256
    $region33: #{tpu_custom_call.1} parent=1 // pred_fallthru
      _
    // Predicated region
    $region34: #{tpu_custom_call.1} parent=1 // pred_check
      _
    $region35: #{tpu_custom_call.1} parent=1 // pred_check_branch
      %95 = sbr.rel (0) target = $region37
    $region36: #{tpu_custom_call.1} parent=1 // pred_region
      %96 = dma.done [#allocation6], 256
    $region37: #{tpu_custom_call.1} parent=1 // pred_fallthru
      _
    // Predicated region
    $region38: #{tpu_custom_call.1} parent=1 // pred_check
      _
    $region39: #{tpu_custom_call.1} parent=1 // pred_check_branch
      %98 = sbr.rel (0) target = $region41
    $region40: #{tpu_custom_call.1} parent=1 // pred_region
      %99 = dma.done [#allocation6], 512
    $region41: #{tpu_custom_call.1} parent=1 // pred_fallthru
      _
    // Predicated region
    $region42: #{tpu_custom_call.1} parent=1 // pred_check
      _
    $region43: #{tpu_custom_call.1} parent=1 // pred_check_branch
      %101 = sbr.rel (0) target = $region45
    $region44: #{tpu_custom_call.1} parent=1 // pred_region
      %102 = dma.done [#allocation9], 1152
    $region45: #{tpu_custom_call.1} parent=1 // pred_fallthru
      _
    // Predicated region
    $region46: #{tpu_custom_call.1} parent=1 // pred_check
      _
    $region47: #{tpu_custom_call.1} parent=1 // pred_check_branch
      %104 = sbr.rel (0) target = $region49
    $region48: #{tpu_custom_call.1} parent=1 // pred_region
      %105 = dma.done [#allocation9], 2048
    $region49: #{tpu_custom_call.1} parent=1 // pred_fallthru
      _
    // Predicated region
    $region50: #{tpu_custom_call.1} parent=1 // pred_check
      _
    $region51: #{tpu_custom_call.1} parent=1 // pred_check_branch
      %107 = sbr.rel (0) target = $region53
    $region52: #{tpu_custom_call.1} parent=1 // pred_region
      %108 = dma.done [#allocation12], 2048
    $region53: #{tpu_custom_call.1} parent=1 // pred_fallthru
      _
    %v109 = vld [vmem:[#allocation2] sm:$0xff]
    %v110 = vld [vmem:[#allocation2 + $0x8] sm:$0xff]
    %v111 = vld [vmem:[#allocation5] sm:$0xff]
    %v112 = vld [vmem:[#allocation5 + $0x8] sm:$0xff]
    %v113 = vld [vmem:[#allocation8] sm:$0xff]
    %v114 = vld [vmem:[#allocation8 + $0x8] sm:$0xff]
    %v115 = vld [vmem:[#allocation8 + $0x10] sm:$0xff]
    %v116 = vld [vmem:[#allocation8 + $0x18] sm:$0xff]
    %v117 = vld [vmem:[#allocation8 + $0x20] sm:$0xff]
    %v118 = vld [vmem:[#allocation8 + $0x28] sm:$0xff]
    %v119 = vld [vmem:[#allocation8 + $0x30] sm:$0xff]
    %v120 = vld [vmem:[#allocation8 + $0x38] sm:$0xff]
    %v121 = vld [vmem:[#allocation8 + $0x40] sm:$0xff]
    %v122 = vld [vmem:[%s4] sm:$0x7]
    %v124 = vlaneseq
    %v125 = vshrl.u32 %v124, 7
    %v126 = vsub.s32 0, %v125
    %v127 = vrot.slane %v122, %v126
    %v128 = vlaneseq
    %v129 = vshrl.u32 %v128, 7
    %v130 = vsub.s32 1, %v129
    %v131 = vrot.slane %v122, %v130
    %v132 = vlaneseq
    %v133 = vshrl.u32 %v132, 7
    %v134 = vsub.s32 2, %v133
    %v135 = vrot.slane %v122, %v134
    %vm139 = vcmask 195584
    %v141 = vsel %vm139, %v111, 0
    %v144 = vsel %vm139, %v112, 0
    %146 = vmatprep.subr.mxu0 %v114
    %147 = vmatpush1.msra.mxu0 %v113
    %148 = vmatprep.subr.mxu0 %v117
    %149 = vmatpush1.msra.mxu0 %v116
    %150 = vmatprep.subr.mxu0 %v120
    %151 = vmatpush1.msra.mxu0 %v119
    %152 = vmatprep.subr.mxu0 0.0
    %153 = vmatpush1.msra.mxu0 0.0
    %154 = vmatprep.subr.mxu0 0.0
    %155 = vmatpush1.msra.mxu0 0.0
    %156 = vmatprep.subr.mxu0 0.0
    %157 = vmatpush1.msra.mxu0 0.0
    %158 = vmatprep.subr.mxu0 0.0
    %159 = vmatpush1.msra.mxu0 0.0
    %160 = vmatprep.subr.mxu0 0.0
    %161 = vmatpush1.msra.mxu0 0.0
    %162 = vmatprep.subr.mxu0 0.0
    %163 = vmatpush1.msra.mxu0 0.0
    %164 = vmatprep.subr.mxu0 0.0
    %165 = vmatpush1.msra.mxu0 0.0
    %166 = vmatprep.subr.mxu0 0.0
    %167 = vmatpush1.msra.mxu0 0.0
    %168 = vmatprep.subr.mxu0 0.0
    %169 = vmatpush1.msra.mxu0 0.0
    %170 = vmatprep.subr.mxu0 0.0
    %171 = vmatpush1.msra.mxu0 0.0
    %172 = vmatprep.subr.mxu0 0.0
    %173 = vmatpush1.msra.mxu0 0.0
    %174 = vmatprep.subr.mxu0 0.0
    %175 = vmatpush1.msra.mxu0 0.0
    %176 = vmatprep.subr.mxu0 0.0
    %177 = vmatpush1.msra.mxu0 0.0
    %178 = vmatprep.subr.mxu0 0.0
    %179 = vmatpush1.msra.mxu0 0.0
    %180 = vmatprep.subr.mxu0 0.0
    %181 = vmatpush1.msra.mxu0 0.0
    %182 = vmatprep.subr.mxu0 0.0
    %183 = vmatpush1.msra.mxu0 0.0
    %184 = vmatprep.subr.mxu0 0.0
    %185 = vmatpush1.msra.mxu0 0.0
    %186 = vmatprep.subr.mxu0 0.0
    %187 = vmatpush1.msra.mxu0 0.0
    %188 = vmatprep.subr.mxu0 0.0
    %189 = vmatpush1.msra.mxu0 0.0
    %190 = vmatprep.subr.mxu0 0.0
    %191 = vmatpush1.msra.mxu0 0.0
    %192 = vmatprep.subr.mxu0 0.0
    %193 = vmatpush1.msra.mxu0 0.0
    %194 = vmatprep.subr.mxu0 0.0
    %195 = vmatpush1.msra.mxu0 0.0
    %196 = vmatprep.subr.mxu0 0.0
    %197 = vmatpush1.msra.mxu0 0.0
    %198 = vmatprep.subr.mxu0 0.0
    %199 = vmatpush1.msra.mxu0 0.0
    %200 = vmatprep.subr.mxu0 0.0
    %201 = vmatpush1.msra.mxu0 0.0
    %202 = vmatprep.subr.mxu0 0.0
    %203 = vmatpush1.msra.mxu0 0.0
    %204 = vmatprep.subr.mxu0 0.0
    %205 = vmatpush1.msra.mxu0 0.0
    %206 = vmatprep.subr.mxu0 0.0
    %207 = vmatpush1.msra.mxu0 0.0
    %208 = vmatprep.subr.mxu0 0.0
    %209 = vmatpush1.msra.mxu0 0.0
    %210 = vmatprep.mubr.f32.mxu0 0.0
    %211 = vmatmul.mubr.f32.gmra.mrb[0].mxu0 %v141
    %v212 = vpop.f32.mrb[0].mxu0
    %v213 = vadd.f32 %v127, %v212
    %v214 = vpop.f32.mrb[0].mxu0
    %v215 = vadd.f32 %v131, %v214
    %216 = vmatprep.mubr.f32.mxu0 0.0
    %217 = vmatmul.mubr.f32.gmra.mrb[0].mxu0 %v144
    %v218 = vpop.f32.mrb[0].mxu0
    %v219 = vadd.f32 %v127, %v218
    %v220 = vpop.f32.mrb[0].mxu0
    %v221 = vadd.f32 %v131, %v220
    %222 = vdwg.mxu0
    %223 = vmatprep.subr.mxu0 0.0
    %224 = vmatpush1.msra.mxu0 %v115
    %225 = vmatprep.subr.mxu0 0.0
    %226 = vmatpush1.msra.mxu0 %v118
    %227 = vmatprep.subr.mxu0 0.0
    %228 = vmatpush1.msra.mxu0 %v121
    %229 = vmatprep.subr.mxu0 0.0
    %230 = vmatpush1.msra.mxu0 0.0
    %231 = vmatprep.subr.mxu0 0.0
    %232 = vmatpush1.msra.mxu0 0.0
    %233 = vmatprep.subr.mxu0 0.0
    %234 = vmatpush1.msra.mxu0 0.0
    %235 = vmatprep.subr.mxu0 0.0
    %236 = vmatpush1.msra.mxu0 0.0
    %237 = vmatprep.subr.mxu0 0.0
    %238 = vmatpush1.msra.mxu0 0.0
    %239 = vmatprep.subr.mxu0 0.0
    %240 = vmatpush1.msra.mxu0 0.0
    %241 = vmatprep.subr.mxu0 0.0
    %242 = vmatpush1.msra.mxu0 0.0
    %243 = vmatprep.subr.mxu0 0.0
    %244 = vmatpush1.msra.mxu0 0.0
    %245 = vmatprep.subr.mxu0 0.0
    %246 = vmatpush1.msra.mxu0 0.0
    %247 = vmatprep.subr.mxu0 0.0
    %248 = vmatpush1.msra.mxu0 0.0
    %249 = vmatprep.subr.mxu0 0.0
    %250 = vmatpush1.msra.mxu0 0.0
    %251 = vmatprep.subr.mxu0 0.0
    %252 = vmatpush1.msra.mxu0 0.0
    %253 = vmatprep.subr.mxu0 0.0
    %254 = vmatpush1.msra.mxu0 0.0
    %255 = vmatprep.subr.mxu0 0.0
    %256 = vmatpush1.msra.mxu0 0.0
    %257 = vmatprep.subr.mxu0 0.0
    %258 = vmatpush1.msra.mxu0 0.0
    %259 = vmatprep.subr.mxu0 0.0
    %260 = vmatpush1.msra.mxu0 0.0
    %261 = vmatprep.subr.mxu0 0.0
    %262 = vmatpush1.msra.mxu0 0.0
    %263 = vmatprep.subr.mxu0 0.0
    %264 = vmatpush1.msra.mxu0 0.0
    %265 = vmatprep.subr.mxu0 0.0
    %266 = vmatpush1.msra.mxu0 0.0
    %267 = vmatprep.subr.mxu0 0.0
    %268 = vmatpush1.msra.mxu0 0.0
    %269 = vmatprep.subr.mxu0 0.0
    %270 = vmatpush1.msra.mxu0 0.0
    %271 = vmatprep.subr.mxu0 0.0
    %272 = vmatpush1.msra.mxu0 0.0
    %273 = vmatprep.subr.mxu0 0.0
    %274 = vmatpush1.msra.mxu0 0.0
    %275 = vmatprep.subr.mxu0 0.0
    %276 = vmatpush1.msra.mxu0 0.0
    %277 = vmatprep.subr.mxu0 0.0
    %278 = vmatpush1.msra.mxu0 0.0
    %279 = vmatprep.subr.mxu0 0.0
    %280 = vmatpush1.msra.mxu0 0.0
    %281 = vmatprep.subr.mxu0 0.0
    %282 = vmatpush1.msra.mxu0 0.0
    %283 = vmatprep.subr.mxu0 0.0
    %284 = vmatpush1.msra.mxu0 0.0
    %285 = vmatprep.subr.mxu0 0.0
    %286 = vmatpush1.msra.mxu0 0.0
    %287 = vmatprep.mubr.f32.mxu0 0.0
    %288 = vmatmul.mubr.f32.gmra.mrb[0].mxu0 %v141
    %v289 = vpop.f32.mrb[0].mxu0
    %v290 = vadd.f32 %v135, %v289
    %v291 = vpop.f32.mrb[0].mxu0
    %292 = vmatprep.mubr.f32.mxu0 0.0
    %293 = vmatmul.mubr.f32.gmra.mrb[0].mxu0 %v144
    %v294 = vpop.f32.mrb[0].mxu0
    %v295 = vadd.f32 %v135, %v294
    %v296 = vpop.f32.mrb[0].mxu0
    %297 = vdwg.mxu0
    %v298 = vld [vmem:[#allocation7] sm:$0xff]
    %v299 = vld [vmem:[#allocation7 + $0x8] sm:$0xff]
    %v300 = vld [vmem:[#allocation7 + $0x10] sm:$0xff]
    %v301 = vld [vmem:[#allocation7 + $0x18] sm:$0xff]
    %vm302 = vcmask 261120
    %v304 = vsel %vm302, %v109, 0
    %v307 = vsel %vm302, %v110, 0
    %309 = vmatprep.subr.mxu0 0.0
    %310 = vmatpush1.msra.mxu0 %v298
    %311 = vmatprep.subr.mxu0 0.0
    %312 = vmatpush1.msra.mxu0 %v299
    %313 = vmatprep.subr.mxu0 0.0
    %314 = vmatpush1.msra.mxu0 %v300
    %315 = vmatprep.subr.mxu0 0.0
    %316 = vmatpush1.msra.mxu0 %v301
    %317 = vmatprep.subr.mxu0 0.0
    %318 = vmatpush1.msra.mxu0 0.0
    %319 = vmatprep.subr.mxu0 0.0
    %320 = vmatpush1.msra.mxu0 0.0
    %321 = vmatprep.subr.mxu0 0.0
    %322 = vmatpush1.msra.mxu0 0.0
    %323 = vmatprep.subr.mxu0 0.0
    %324 = vmatpush1.msra.mxu0 0.0
    %325 = vmatprep.subr.mxu0 0.0
    %326 = vmatpush1.msra.mxu0 0.0
    %327 = vmatprep.subr.mxu0 0.0
    %328 = vmatpush1.msra.mxu0 0.0
    %329 = vmatprep.subr.mxu0 0.0
    %330 = vmatpush1.msra.mxu0 0.0
    %331 = vmatprep.subr.mxu0 0.0
    %332 = vmatpush1.msra.mxu0 0.0
    %333 = vmatprep.subr.mxu0 0.0
    %334 = vmatpush1.msra.mxu0 0.0
    %335 = vmatprep.subr.mxu0 0.0
    %336 = vmatpush1.msra.mxu0 0.0
    %337 = vmatprep.subr.mxu0 0.0
    %338 = vmatpush1.msra.mxu0 0.0
    %339 = vmatprep.subr.mxu0 0.0
    %340 = vmatpush1.msra.mxu0 0.0
    %341 = vmatprep.subr.mxu0 0.0
    %342 = vmatpush1.msra.mxu0 0.0
    %343 = vmatprep.subr.mxu0 0.0
    %344 = vmatpush1.msra.mxu0 0.0
    %345 = vmatprep.subr.mxu0 0.0
    %346 = vmatpush1.msra.mxu0 0.0
    %347 = vmatprep.subr.mxu0 0.0
    %348 = vmatpush1.msra.mxu0 0.0
    %349 = vmatprep.subr.mxu0 0.0
    %350 = vmatpush1.msra.mxu0 0.0
    %351 = vmatprep.subr.mxu0 0.0
    %352 = vmatpush1.msra.mxu0 0.0
    %353 = vmatprep.subr.mxu0 0.0
    %354 = vmatpush1.msra.mxu0 0.0
    %355 = vmatprep.subr.mxu0 0.0
    %356 = vmatpush1.msra.mxu0 0.0
    %357 = vmatprep.subr.mxu0 0.0
    %358 = vmatpush1.msra.mxu0 0.0
    %359 = vmatprep.subr.mxu0 0.0
    %360 = vmatpush1.msra.mxu0 0.0
    %361 = vmatprep.subr.mxu0 0.0
    %362 = vmatpush1.msra.mxu0 0.0
    %363 = vmatprep.subr.mxu0 0.0
    %364 = vmatpush1.msra.mxu0 0.0
    %365 = vmatprep.subr.mxu0 0.0
    %366 = vmatpush1.msra.mxu0 0.0
    %367 = vmatprep.subr.mxu0 0.0
    %368 = vmatpush1.msra.mxu0 0.0
    %369 = vmatprep.subr.mxu0 0.0
    %370 = vmatpush1.msra.mxu0 0.0
    %371 = vmatprep.subr.mxu0 0.0
    %372 = vmatpush1.msra.mxu0 0.0
    %373 = vmatprep.mubr.f32.mxu0 0.0
    %374 = vmatmul.mubr.f32.gmra.mrb[0].mxu0 %v304
    %v375 = vpop.f32.mrb[0].mxu0
    %v376 = vadd.f32 %v213, %v375
    %v377 = vpop.f32.mrb[0].mxu0
    %378 = vmatprep.mubr.f32.mxu0 0.0
    %379 = vmatmul.mubr.f32.gmra.mrb[0].mxu0 %v307
    %v380 = vpop.f32.mrb[0].mxu0
    %v381 = vadd.f32 %v219, %v380
    %v382 = vpop.f32.mrb[0].mxu0
    %383 = vdwg.mxu0
    %v384 = vld [vmem:[#allocation10] sm:$0xff]
    %v385 = vld [vmem:[#allocation10 + $0x8] sm:$0xff]
    %v386 = vld [vmem:[#allocation10 + $0x10] sm:$0xff]
    %v387 = vld [vmem:[#allocation10 + $0x18] sm:$0xff]
    %v388 = vld [vmem:[#allocation10 + $0x20] sm:$0xff]
    %v389 = vld [vmem:[#allocation10 + $0x28] sm:$0xff]
    %v390 = vld [vmem:[#allocation10 + $0x30] sm:$0xff]
    %v391 = vld [vmem:[#allocation10 + $0x38] sm:$0xff]
    %v392 = vld [vmem:[#allocation10 + $0x40] sm:$0xff]
    %v393 = vld [vmem:[#allocation10 + $0x48] sm:$0xff]
    %v394 = vld [vmem:[#allocation10 + $0x50] sm:$0xff]
    %v395 = vld [vmem:[#allocation10 + $0x58] sm:$0xff]
    %v396 = vld [vmem:[#allocation10 + $0x60] sm:$0xff]
    %v397 = vld [vmem:[#allocation10 + $0x68] sm:$0xff]
    %v398 = vld [vmem:[#allocation10 + $0x70] sm:$0xff]
    %v399 = vld [vmem:[#allocation10 + $0x78] sm:$0xff]
    %400 = vmatprep.subr.mxu0 0.0
    %401 = vmatpush1.msra.mxu0 %v384
    %402 = vmatprep.subr.mxu0 0.0
    %403 = vmatpush1.msra.mxu0 %v385
    %404 = vmatprep.subr.mxu0 0.0
    %405 = vmatpush1.msra.mxu0 %v386
    %406 = vmatprep.subr.mxu0 0.0
    %407 = vmatpush1.msra.mxu0 %v387
    %408 = vmatprep.subr.mxu0 0.0
    %409 = vmatpush1.msra.mxu0 %v388
    %410 = vmatprep.subr.mxu0 0.0
    %411 = vmatpush1.msra.mxu0 %v389
    %412 = vmatprep.subr.mxu0 0.0
    %413 = vmatpush1.msra.mxu0 %v390
    %414 = vmatprep.subr.mxu0 0.0
    %415 = vmatpush1.msra.mxu0 %v391
    %416 = vmatprep.subr.mxu0 0.0
    %417 = vmatpush1.msra.mxu0 %v392
    %418 = vmatprep.subr.mxu0 0.0
    %419 = vmatpush1.msra.mxu0 %v393
    %420 = vmatprep.subr.mxu0 0.0
    %421 = vmatpush1.msra.mxu0 %v394
    %422 = vmatprep.subr.mxu0 0.0
    %423 = vmatpush1.msra.mxu0 %v395
    %424 = vmatprep.subr.mxu0 0.0
    %425 = vmatpush1.msra.mxu0 %v396
    %426 = vmatprep.subr.mxu0 0.0
    %427 = vmatpush1.msra.mxu0 %v397
    %428 = vmatprep.subr.mxu0 0.0
    %429 = vmatpush1.msra.mxu0 %v398
    %430 = vmatprep.subr.mxu0 0.0
    %431 = vmatpush1.msra.mxu0 %v399
    %432 = vmatprep.subr.mxu0 0.0
    %433 = vmatpush1.msra.mxu0 0.0
    %434 = vmatprep.subr.mxu0 0.0
    %435 = vmatpush1.msra.mxu0 0.0
    %436 = vmatprep.subr.mxu0 0.0
    %437 = vmatpush1.msra.mxu0 0.0
    %438 = vmatprep.subr.mxu0 0.0
    %439 = vmatpush1.msra.mxu0 0.0
    %440 = vmatprep.subr.mxu0 0.0
    %441 = vmatpush1.msra.mxu0 0.0
    %442 = vmatprep.subr.mxu0 0.0
    %443 = vmatpush1.msra.mxu0 0.0
    %444 = vmatprep.subr.mxu0 0.0
    %445 = vmatpush1.msra.mxu0 0.0
    %446 = vmatprep.subr.mxu0 0.0
    %447 = vmatpush1.msra.mxu0 0.0
    %448 = vmatprep.subr.mxu0 0.0
    %449 = vmatpush1.msra.mxu0 0.0
    %450 = vmatprep.subr.mxu0 0.0
    %451 = vmatpush1.msra.mxu0 0.0
    %452 = vmatprep.subr.mxu0 0.0
    %453 = vmatpush1.msra.mxu0 0.0
    %454 = vmatprep.subr.mxu0 0.0
    %455 = vmatpush1.msra.mxu0 0.0
    %456 = vmatprep.subr.mxu0 0.0
    %457 = vmatpush1.msra.mxu0 0.0
    %458 = vmatprep.subr.mxu0 0.0
    %459 = vmatpush1.msra.mxu0 0.0
    %460 = vmatprep.subr.mxu0 0.0
    %461 = vmatpush1.msra.mxu0 0.0
    %462 = vmatprep.subr.mxu0 0.0
    %463 = vmatpush1.msra.mxu0 0.0
    %464 = vmatprep.mubr.f32.mxu0 0.0
    %465 = vmatmul.mubr.f32.gmra.mrb[0].mxu0 %v376
    %v466 = vpop.f32.mrb[0].mxu0
    %v467 = vadd.f32 %v215, %v466
    %v468 = vpop.f32.mrb[0].mxu0
    %469 = vmatprep.mubr.f32.mxu0 0.0
    %470 = vmatmul.mubr.f32.gmra.mrb[0].mxu0 %v381
    %v471 = vpop.f32.mrb[0].mxu0
    %v472 = vadd.f32 %v221, %v471
    %v473 = vpop.f32.mrb[0].mxu0
    %474 = vdwg.mxu0
    %v475 = vld [vmem:[#allocation11] sm:$0xff]
    %v476 = vld [vmem:[#allocation11 + $0x8] sm:$0xff]
    %v477 = vld [vmem:[#allocation11 + $0x10] sm:$0xff]
    %v478 = vld [vmem:[#allocation11 + $0x18] sm:$0xff]
    %v479 = vld [vmem:[#allocation11 + $0x20] sm:$0xff]
    %v480 = vld [vmem:[#allocation11 + $0x28] sm:$0xff]
    %v481 = vld [vmem:[#allocation11 + $0x30] sm:$0xff]
    %v482 = vld [vmem:[#allocation11 + $0x38] sm:$0xff]
    %v483 = vld [vmem:[#allocation11 + $0x40] sm:$0xff]
    %v484 = vld [vmem:[#allocation11 + $0x48] sm:$0xff]
    %v485 = vld [vmem:[#allocation11 + $0x50] sm:$0xff]
    %v486 = vld [vmem:[#allocation11 + $0x58] sm:$0xff]
    %v487 = vld [vmem:[#allocation11 + $0x60] sm:$0xff]
    %v488 = vld [vmem:[#allocation11 + $0x68] sm:$0xff]
    %v489 = vld [vmem:[#allocation11 + $0x70] sm:$0xff]
    %v490 = vld [vmem:[#allocation11 + $0x78] sm:$0xff]
    %491 = vmatprep.subr.mxu0 0.0
    %492 = vmatpush1.msra.mxu0 %v475
    %493 = vmatprep.subr.mxu0 0.0
    %494 = vmatpush1.msra.mxu0 %v476
    %495 = vmatprep.subr.mxu0 0.0
    %496 = vmatpush1.msra.mxu0 %v477
    %497 = vmatprep.subr.mxu0 0.0
    %498 = vmatpush1.msra.mxu0 %v478
    %499 = vmatprep.subr.mxu0 0.0
    %500 = vmatpush1.msra.mxu0 %v479
    %501 = vmatprep.subr.mxu0 0.0
    %502 = vmatpush1.msra.mxu0 %v480
    %503 = vmatprep.subr.mxu0 0.0
    %504 = vmatpush1.msra.mxu0 %v481
    %505 = vmatprep.subr.mxu0 0.0
    %506 = vmatpush1.msra.mxu0 %v482
    %507 = vmatprep.subr.mxu0 0.0
    %508 = vmatpush1.msra.mxu0 %v483
    %509 = vmatprep.subr.mxu0 0.0
    %510 = vmatpush1.msra.mxu0 %v484
    %511 = vmatprep.subr.mxu0 0.0
    %512 = vmatpush1.msra.mxu0 %v485
    %513 = vmatprep.subr.mxu0 0.0
    %514 = vmatpush1.msra.mxu0 %v486
    %515 = vmatprep.subr.mxu0 0.0
    %516 = vmatpush1.msra.mxu0 %v487
    %517 = vmatprep.subr.mxu0 0.0
    %518 = vmatpush1.msra.mxu0 %v488
    %519 = vmatprep.subr.mxu0 0.0
    %520 = vmatpush1.msra.mxu0 %v489
    %521 = vmatprep.subr.mxu0 0.0
    %522 = vmatpush1.msra.mxu0 %v490
    %523 = vmatprep.subr.mxu0 0.0
    %524 = vmatpush1.msra.mxu0 0.0
    %525 = vmatprep.subr.mxu0 0.0
    %526 = vmatpush1.msra.mxu0 0.0
    %527 = vmatprep.subr.mxu0 0.0
    %528 = vmatpush1.msra.mxu0 0.0
    %529 = vmatprep.subr.mxu0 0.0
    %530 = vmatpush1.msra.mxu0 0.0
    %531 = vmatprep.subr.mxu0 0.0
    %532 = vmatpush1.msra.mxu0 0.0
    %533 = vmatprep.subr.mxu0 0.0
    %534 = vmatpush1.msra.mxu0 0.0
    %535 = vmatprep.subr.mxu0 0.0
    %536 = vmatpush1.msra.mxu0 0.0
    %537 = vmatprep.subr.mxu0 0.0
    %538 = vmatpush1.msra.mxu0 0.0
    %539 = vmatprep.subr.mxu0 0.0
    %540 = vmatpush1.msra.mxu0 0.0
    %541 = vmatprep.subr.mxu0 0.0
    %542 = vmatpush1.msra.mxu0 0.0
    %543 = vmatprep.subr.mxu0 0.0
    %544 = vmatpush1.msra.mxu0 0.0
    %545 = vmatprep.subr.mxu0 0.0
    %546 = vmatpush1.msra.mxu0 0.0
    %547 = vmatprep.subr.mxu0 0.0
    %548 = vmatpush1.msra.mxu0 0.0
    %549 = vmatprep.subr.mxu0 0.0
    %550 = vmatpush1.msra.mxu0 0.0
    %551 = vmatprep.subr.mxu0 0.0
    %552 = vmatpush1.msra.mxu0 0.0
    %553 = vmatprep.subr.mxu0 0.0
    %554 = vmatpush1.msra.mxu0 0.0
    %555 = vmatprep.mubr.f32.mxu0 0.0
    %556 = vmatmul.mubr.f32.gmra.mrb[0].mxu0 %v467
    %v557 = vpop.f32.mrb[0].mxu0
    %v558 = vadd.f32 %v290, %v557
    %v559 = vpop.f32.mrb[0].mxu0
    %560 = vmatprep.mubr.f32.mxu0 0.0
    %561 = vmatmul.mubr.f32.gmra.mrb[0].mxu0 %v472
    %v562 = vpop.f32.mrb[0].mxu0
    %v563 = vadd.f32 %v295, %v562
    %v564 = vpop.f32.mrb[0].mxu0
    %565 = vdwg.mxu0
    %566 = vst [vmem:[#allocation13] sm:$0xff] %v558
    %567 = vst [vmem:[#allocation13 + $0x8] sm:$0xff] %v563
    // Predicated region
    $region54: #{tpu_custom_call.1} parent=1 // pred_check
      _
    $region55: #{tpu_custom_call.1} parent=1 // pred_check_branch
      %569 = sbr.rel (0) target = $region57
    $region56: #{tpu_custom_call.1} parent=1 // pred_region
      %s571 = ssub.s32 256, 256
      %572 = vsyncadd [#allocation4], %s571
      %s573 = sshll.u32 [#allocation13], 4
      %s574 = int_to_ptr.vmem [resolvable:$true] %s573
      %579 = dma.vmem_to_hbm [thread:$0]  %s574, 256, %s7, [#allocation4], 128, 128, 8
    $region57: #{tpu_custom_call.1} parent=1 // pred_fallthru
      _
    // Predicated region
    $region58: #{tpu_custom_call.1} parent=1 // pred_check
      _
    $region59: #{tpu_custom_call.1} parent=1 // pred_check_branch
      %581 = sbr.rel (0) target = $region61
    $region60: #{tpu_custom_call.1} parent=1 // pred_region
      %582 = dma.done [#allocation4], 256
    $region61: #{tpu_custom_call.1} parent=1 // pred_fallthru
      _
    %583 = vsyncpa [#allocation3], 1
    %584 = vsyncpa [#allocation6], 1
    %585 = vsyncpa [#allocation9], 1
    %586 = vsyncpa [#allocation12], 1
    %587 = vsyncpa [#allocation4], 1

</llo_original>
